<compile_context>
chip_gen: v6e
topology: v6e:2x2x1
jax: 0.10.0
libtpu: 0.0.40
codegen_flags: <defaults>
</compile_context>

<pallas_src>
import functools

import jax
import jax.numpy as jnp
from jax import lax
from jax.experimental import pallas as pl
from jax.experimental.pallas import tpu as pltpu

_LANE = 128       # lane width; also the running top-k candidate vector (needs 2*k <= 128)
_OUT_ROWS = 8     # sublane-aligned rows per split in the partial outputs


def _round_up(x, m):
    return ((x + m - 1) // m) * m


def _extract_and_insert(cand, work, idx, lane, k, insert_base):
    """Pull the k largest values of `work` (first-occurrence masking via `idx` handles
    duplicates) and insert them into lanes [insert_base, insert_base+k) of the
    (1, _LANE) candidate vector `cand`.  Statically unrolled; k == 1 needs no idx."""
    big = jnp.int32(1 << 30)
    for j in range(k):
        m = jnp.max(work)
        cand = jnp.where(lane == (insert_base + j), m, cand)
        if j + 1 < k:
            first = jnp.min(jnp.where(work == m, idx, big))
            work = jnp.where(idx == first, -jnp.inf, work)
    return cand


def _select_topk(cand, lane, k):
    """Keep the k largest values of the (1, _LANE) vector `cand` in lanes [0, k);
    remaining lanes are -inf.  Statically unrolled."""
    new = jnp.full(cand.shape, -jnp.inf, dtype=cand.dtype)
    big = jnp.int32(1 << 30)
    for j in range(k):
        m = jnp.max(cand)
        new = jnp.where(lane == j, m, new)
        if j + 1 < k:
            first = jnp.min(jnp.where(cand == m, lane, big))
            cand = jnp.where(lane == first, -jnp.inf, cand)
    return new


def _ousm_mse_kernel(x_ref, y_ref, tot_out_ref, topk_out_ref,
                     tot_acc_ref, topk_acc_ref, *,
                     k, use_topk, n_samples, tile_rows, group, feat_c,
                     tiles_per_split, needs_mask):
    s = pl.program_id(0)            # split index ("parallel"; one per TensorCore on v7x)
    i = pl.program_id(1)            # tile index within the split ("arbitrary")
    t = s * tiles_per_split + i     # global (unclamped) tile index

    @pl.when(i == 0)
    def _init():
        tot_acc_ref[...] = jnp.zeros_like(tot_acc_ref)
        if use_topk:
            topk_acc_ref[...] = jnp.full_like(topk_acc_ref, -jnp.inf)

    x = x_ref[...].astype(jnp.float32)
    y = y_ref[...].astype(jnp.float32)
    diff = x - y
    sq = diff * diff                        # elementwise squared error (VPU)
    rows, cols = sq.shape

    # Per-sample (un-normalised) squared-error, laid out (rows, samples_per_row).
    if group == 1:
        # one sample per row: SSE over the full feature axis
        work = jnp.sum(sq, axis=1, keepdims=True)           # (rows, 1)
        spr = 1
    elif feat_c == 1:
        # 1-D regression input packed lane-dense: every element is a sample
        work = sq                                           # (rows, 128)
        spr = cols
    else:
        # `group` samples of `feat_c` features per 128-lane row: per-sample SSE via a
        # tiny (128, group) 0/1 matmul on the otherwise idle MXU.
        l_i = lax.broadcasted_iota(jnp.int32, (cols, group), 0)
        g_i = lax.broadcasted_iota(jnp.int32, (cols, group), 1)
        gmat = ((l_i >= g_i * feat_c) & (l_i < (g_i + 1) * feat_c)).astype(jnp.float32)
        work = jnp.dot(sq, gmat, preferred_element_type=jnp.float32)   # (rows, group)
        spr = group

    # Sample indices / validity are only materialised when actually needed
    # (edge masking, or first-occurrence tie-breaking for k > 1).
    idx = None
    valid = None
    if needs_mask or (use_topk and k > 1):
        r_i = lax.broadcasted_iota(jnp.int32, (rows, spr), 0)
        c_i = lax.broadcasted_iota(jnp.int32, (rows, spr), 1)
        idx = (t * tile_rows + r_i) * spr + c_i
        if needs_mask:
            valid = idx < n_samples

    # Mask at per-sample granularity (jnp.where selects, so garbage rows are discarded).
    contrib = jnp.where(valid, work, 0.0) if needs_mask else work
    tile_sum = jnp.sum(contrib)

    # Lane-cycled running total: 128 independent accumulation chains for precision.
    lane = lax.broadcasted_iota(jnp.int32, (1, _LANE), 1)
    tot_acc_ref[...] += jnp.where(lane == (i % _LANE), tile_sum, 0.0)

    if use_topk:
        wk = jnp.where(valid, work, -jnp.inf) if needs_mask else work
        cand = _extract_and_insert(topk_acc_ref[...], wk, idx, lane, k, insert_base=k)
        topk_acc_ref[...] = _select_topk(cand, lane, k)

    @pl.when(i == tiles_per_split - 1)
    def _finalize():
        row0 = lax.broadcasted_iota(jnp.int32, (_OUT_ROWS, _LANE), 0) == 0
        tot_out_ref[...] = jnp.where(row0, tot_acc_ref[...], 0.0)
        if use_topk:
            topk_out_ref[...] = jnp.where(row0, topk_acc_ref[...], -jnp.inf)
        else:
            topk_out_ref[...] = jnp.full((_OUT_ROWS, _LANE), -jnp.inf, jnp.float32)


def ousm_loss(logits, targets, *, k=1, ousm=False, _tile_rows=None, _n_splits=None):
    """JAX/Pallas equivalent of OUSMLoss(k=k, loss='MSELoss', ousm=ousm).forward."""
    logits = jnp.asarray(logits)
    targets = jnp.asarray(targets)

    # _check_input_type('MSELoss'): full squeeze (matches torch.Tensor.squeeze(), which
    # removes ALL singleton dims) is only triggered when the trailing dim is 1, exactly
    # like the PyTorch reference.  Non-float targets are up-cast like targets.float();
    # float targets are left in their native dtype (exact under the in-kernel f32 cast).
    if logits.ndim >= 1 and logits.shape[-1] == 1:
        logits = jnp.squeeze(logits)
    if not jnp.issubdtype(targets.dtype, jnp.floating):
        targets = targets.astype(jnp.float32)
    targets = jnp.reshape(targets, logits.shape)

    if logits.ndim == 0:
        logits = logits.reshape(1)
        targets = targets.reshape(1)
    if logits.ndim > 2:
        logits = logits.reshape(logits.shape[0], -1)
        targets = targets.reshape(targets.shape[0], -1)

    x_item = jnp.dtype(logits.dtype).itemsize
    y_item = jnp.dtype(targets.dtype).itemsize
    sub_pack = max(32 // x_item, 32 // y_item)    # 8 (f32), 16 (bf16), 32 (int8/fp8)

    if logits.ndim == 1:
        # regression: every element is a sample -> lay out lane-dense as (rows, 128)
        n_samples, feat_c, group = int(logits.shape[0]), 1, _LANE
        rows = pl.cdiv(n_samples, _LANE)
        pad = rows * _LANE - n_samples
        if pad:
            logits = jnp.pad(logits, (0, pad))
            targets = jnp.pad(targets, (0, pad))
        x2 = logits.reshape(rows, _LANE)
        y2 = targets.reshape(rows, _LANE)
    else:
        n_samples, feat_c = int(logits.shape[0]), int(logits.shape[1])
        if 1 < feat_c <= 64 and _LANE % feat_c == 0:
            # small feature dim: pack `group` samples per 128-lane row so the HBM stream
            # (and every (8,128) VMEM tile) is fully lane-dense.
            group = _LANE // feat_c
            pad = _round_up(max(n_samples, 1), group * sub_pack) - n_samples
            if pad:
                logits = jnp.pad(logits, ((0, pad), (0, 0)))
                targets = jnp.pad(targets, ((0, pad), (0, 0)))
            rows = (n_samples + pad) // group
            x2 = logits.reshape(rows, _LANE)
            y2 = targets.reshape(rows, _LANE)
        else:
            group = 1
            x2, y2 = logits, targets

    R, C = int(x2.shape[0]), int(x2.shape[1])
    use_topk = bool(ousm) and k > 0 and (n_samples - k) > 0
    if use_topk:
        assert 2 * k <= _LANE, "k too large for the single-vreg running top-k buffer"

    # ---- generation-aware block sizing (v7x: 64 MiB VMEM/TC, v5e/v6e: 128 MiB) ----
    try:
        vmem_cap = int(pltpu.get_tpu_info().vmem_capacity_bytes)
    except Exception:  # non-TPU tracing / very old runtimes
        vmem_cap = 128 * 1024 * 1024
    if vmem_cap <= 64 * 1024 * 1024:
        blk_budget = 4 * 1024 * 1024       # bytes of one input's pipelined block
        vmem_limit = 48 * 1024 * 1024
    else:
        blk_budget = 8 * 1024 * 1024
        vmem_limit = 96 * 1024 * 1024
    blk_budget = max(256 * 1024, min(blk_budget, vmem_cap // 16))
    vmem_limit = min(vmem_limit, (vmem_cap * 3) // 4)

    lane_cols = _round_up(C, _LANE)        # padded lane width of one row in VMEM
    if _tile_rows is None:
        tile_rows = blk_budget // (lane_cols * max(x_item, y_item))
    else:
        tile_rows = max(1, int(_tile_rows))
    if tile_rows >= R:
        tile_rows = R                                      # full extent (always legal)
    else:
        tile_rows = max(sub_pack, (tile_rows // sub_pack) * sub_pack)
        tile_rows = min(tile_rows, R)

    # Keep the default 2-deep pipelining; just make sure the scoped limit covers the
    # double-buffered inputs plus in-kernel f32 temporaries.
    est = tile_rows * lane_cols * (2 * (x_item + y_item) + 6 * 4) + (2 << 20)
    if est > vmem_limit:
        # TODO(synk): add a feature-axis grid dimension for extremely wide rows instead
        # of relying on VMEM headroom alone.
        vmem_limit = min((vmem_cap * 9) // 10, _round_up(est, 1 << 20))

    n_tiles = pl.cdiv(R, tile_rows)

    # ---- optional two-TensorCore split (v7x-class); single stream elsewhere ----
    if _n_splits is not None:
        n_splits = max(1, int(_n_splits))
    elif vmem_cap <= 64 * 1024 * 1024 and n_tiles >= 2:
        # TODO(synk): switch to an explicit core-count query once TpuInfo exposes it.
        n_splits = 2
    else:
        n_splits = 1
    n_splits = min(n_splits, n_tiles)
    tps = pl.cdiv(n_tiles, n_splits)

    covered = n_splits * tps * tile_rows * group     # samples addressed by the grid
    needs_mask = covered != n_samples

    last = n_tiles - 1
    if n_splits * tps == n_tiles:
        def in_map(s, i):
            return (s * tps + i, 0)
    else:
        def in_map(s, i):                            # clamp dead trailing iterations
            return (jnp.minimum(s * tps + i, last), 0)

    kernel = functools.partial(
        _ousm_mse_kernel, k=int(k), use_topk=use_topk, n_samples=n_samples,
        tile_rows=tile_rows, group=group, feat_c=feat_c,
        tiles_per_split=tps, needs_mask=needs_mask)

    cost = pl.CostEstimate(
        flops=3 * R * C,
        transcendentals=0,
        bytes_accessed=R * C * (x_item + y_item)
        + 2 * n_splits * _OUT_ROWS * _LANE * 4)

    totals, topk = pl.pallas_call(
        kernel,
        out_shape=(jax.ShapeDtypeStruct((n_splits * _OUT_ROWS, _LANE), jnp.float32),
                   jax.ShapeDtypeStruct((n_splits * _OUT_ROWS, _LANE), jnp.float32)),
        grid=(n_splits, tps),
        in_specs=[
            pl.BlockSpec((tile_rows, C), in_map),
            pl.BlockSpec((tile_rows, C), in_map),
        ],
        out_specs=(pl.BlockSpec((_OUT_ROWS, _LANE), lambda s, i: (s, 0)),
                   pl.BlockSpec((_OUT_ROWS, _LANE), lambda s, i: (s, 0))),
        scratch_shapes=[
            pltpu.VMEM((1, _LANE), jnp.float32),   # lane-cycled running total
            pltpu.VMEM((1, _LANE), jnp.float32),   # running k-largest per-sample losses
        ],
        compiler_params=pltpu.CompilerParams(
            dimension_semantics=("parallel", "arbitrary"),
            vmem_limit_bytes=int(vmem_limit)),
        cost_estimate=cost,
    )(x2, y2)

    # Tiny epilogue: merge the per-split partials into the scalar loss.
    total = jnp.sum(totals)
    if use_topk:
        dropped = jnp.sum(lax.top_k(topk.reshape(-1), int(k))[0])
        return (total - dropped) / (feat_c * (n_samples - k))
    return total / (n_samples * feat_c)


def _reference(logits, targets, *, k=1, ousm=False):
    x = jnp.asarray(logits, jnp.float32)
    y = jnp.asarray(targets, jnp.float32)
    if x.ndim >= 1 and x.shape[-1] == 1:
        x = jnp.squeeze(x)
    y = jnp.reshape(y, x.shape)
    sq = (x - y) ** 2
    b = x.shape[0]
    if ousm and k > 0 and b - k > 0:
        per = sq if sq.ndim == 1 else sq.mean(axis=1)
        kept = jnp.sort(per)[: b - k]       # drop the k largest
        return kept.mean()
    return sq.mean()


if __name__ == "__main__":
    key = jax.random.PRNGKey(0)
    ks = jax.random.split(key, 12)

    # 2-D case with a small feature dim (exercises lane-dense packing, C=32 -> 4/row)
    B, D = 8, 32
    logits2d = jax.random.normal(ks[0], (B, D), dtype=jnp.float32)
    targets2d = jax.random.normal(ks[1], (B, D), dtype=jnp.float32)

    # regression case (typical OUSM usage): logits (16, 1) squeezed to (16,)
    logits1d = jax.random.normal(ks[2], (16, 1), dtype=jnp.float32)
    targets1d = jax.random.normal(ks[3], (16,), dtype=jnp.float32)

    # bf16 stream with the 16-row sublane pack (two tiles, ragged tail)
    logits_bf = jax.random.normal(ks[4], (24, 256), dtype=jnp.float32).astype(jnp.bfloat16)
    targets_bf = jax.random.normal(ks[5], (24, 256), dtype=jnp.float32).astype(jnp.bfloat16)

    # unpacked 2-D multi-tile / ragged case (accumulation + cross-tile top-k merge)
    logits_mt = jax.random.normal(ks[6], (20, 256), dtype=jnp.float32)
    targets_mt = jax.random.normal(ks[7], (20, 256), dtype=jnp.float32)

    # lane-dense 1-D multi-tile case
    logits_1d_big = jax.random.normal(ks[8], (2085,), dtype=jnp.float32)
    targets_1d_big = jax.random.normal(ks[9], (2085,), dtype=jnp.float32)

    # packed small-C, batch not a multiple of the pack, multi-tile
    logits_pk = jax.random.normal(ks[10], (70, 16), dtype=jnp.float32)
    targets_pk = jax.random.normal(ks[11], (70, 16), dtype=jnp.float32)

    # single bigger block (no masking path, k>1 tie-break without edge mask)
    logits_big = jax.random.normal(ks[6], (3000, 128), dtype=jnp.float32)
    targets_big = jax.random.normal(ks[7], (3000, 128), dtype=jnp.float32)

    checks = [
        (ousm_loss(logits2d, targets2d, k=1, ousm=True),
         _reference(logits2d, targets2d, k=1, ousm=True)),
        (ousm_loss(logits2d, targets2d, k=1, ousm=False),
         _reference(logits2d, targets2d, k=1, ousm=False)),
        (ousm_loss(logits2d, targets2d, k=2, ousm=True),
         _reference(logits2d, targets2d, k=2, ousm=True)),
        (ousm_loss(logits1d, targets1d, k=1, ousm=True),
         _reference(logits1d, targets1d, k=1, ousm=True)),
        (ousm_loss(logits1d, targets1d, k=3, ousm=True),
         _reference(logits1d, targets1d, k=3, ousm=True)),
        (ousm_loss(logits1d, targets1d, k=1, ousm=False),
         _reference(logits1d, targets1d, k=1, ousm=False)),
        (ousm_loss(logits_bf, targets_bf, k=1, ousm=True, _tile_rows=16),
         _reference(logits_bf, targets_bf, k=1, ousm=True)),
        (ousm_loss(logits_mt, targets_mt, k=2, ousm=True, _tile_rows=8),
         _reference(logits_mt, targets_mt, k=2, ousm=True)),
        # same input through the two-core split path (runs sequentially on 1-TC chips)
        (ousm_loss(logits_mt, targets_mt, k=2, ousm=True, _tile_rows=8, _n_splits=2),
         _reference(logits_mt, targets_mt, k=2, ousm=True)),
        (ousm_loss(logits_1d_big, targets_1d_big, k=2, ousm=True, _tile_rows=8),
         _reference(logits_1d_big, targets_1d_big, k=2, ousm=True)),
        (ousm_loss(logits_1d_big, targets_1d_big, k=2, ousm=True, _tile_rows=8, _n_splits=2),
         _reference(logits_1d_big, targets_1d_big, k=2, ousm=True)),
        (ousm_loss(logits_pk, targets_pk, k=2, ousm=True, _tile_rows=8, _n_splits=2),
         _reference(logits_pk, targets_pk, k=2, ousm=True)),
        (ousm_loss(logits_big, targets_big, k=2, ousm=True),
         _reference(logits_big, targets_big, k=2, ousm=True)),
    ]
    for got, want in checks:
        got = jax.block_until_ready(got)
        assert jnp.allclose(got, want, rtol=5e-5, atol=1e-5), (got, want)

    print("KERNEL_OK")
</pallas_src>

<mosaic_0001>
module attributes {stable_mosaic.version = 11 : i64} {
  func.func @_ousm_mse_kernel(%arg0: i32, %arg1: i32, %arg2: memref<8x128xf32, #tpu.memory_space<vmem>>, %arg3: memref<8x128xf32, #tpu.memory_space<vmem>>, %arg4: memref<8x128xf32, #tpu.memory_space<vmem>>, %arg5: memref<8x128xf32, #tpu.memory_space<vmem>>, %arg6: memref<1x128xf32, #tpu.memory_space<vmem>>, %arg7: memref<1x128xf32, #tpu.memory_space<vmem>>) attributes {dimension_semantics = [#tpu.dimension_semantics<parallel>, #tpu.dimension_semantics<arbitrary>], iteration_bounds = array<i64: 1, 1>, scalar_prefetch = 0 : i64, scratch_operands = 2 : i64, tpu.core_type = #tpu.core_type<tc>, window_params = [{transform_indices = @transform_0, window_bounds = array<i64: 8, 128>}, {transform_indices = @transform_1, window_bounds = array<i64: 8, 128>}, {transform_indices = @transform_2, window_bounds = array<i64: 8, 128>}, {transform_indices = @transform_3, window_bounds = array<i64: 8, 128>}]} {
    %c1_i32 = arith.constant 1 : i32
    %0 = arith.muli %arg0, %c1_i32 : i32
    %1 = arith.addi %0, %arg1 : i32
    %c0_i32 = arith.constant 0 : i32
    %2 = arith.cmpi eq, %arg1, %c0_i32 : i32
    %3 = arith.extui %2 : i1 to i32
    %c0_i32_0 = arith.constant 0 : i32
    %4 = arith.cmpi ne, %3, %c0_i32_0 : i32
    scf.if %4 {
      %cst_31 = arith.constant 0.000000e+00 : f32
      %82 = vector.broadcast %cst_31 : f32 to vector<1x128xf32>
      %c0_32 = arith.constant 0 : index
      %c0_33 = arith.constant 0 : index
      %83 = vector.load %arg6[%c0_32, %c0_33] : memref<1x128xf32, #tpu.memory_space<vmem>>, vector<1x128xf32>
      tpu.vector_store %arg6[%c0_32, %c0_33], %82 {strides = array<i32>} : memref<1x128xf32, #tpu.memory_space<vmem>>, vector<1x128xf32>,
      %cst_34 = arith.constant 0xFF800000 : f32
      %84 = vector.broadcast %cst_34 : f32 to vector<1x128xf32>
      %c0_35 = arith.constant 0 : index
      %c0_36 = arith.constant 0 : index
      %85 = vector.load %arg7[%c0_35, %c0_36] : memref<1x128xf32, #tpu.memory_space<vmem>>, vector<1x128xf32>
      tpu.vector_store %arg7[%c0_35, %c0_36], %84 {strides = array<i32>} : memref<1x128xf32, #tpu.memory_space<vmem>>, vector<1x128xf32>,
    } else {
    }
    %c0 = arith.constant 0 : index
    %c0_1 = arith.constant 0 : index
    %5 = vector.load %arg2[%c0, %c0_1] : memref<8x128xf32, #tpu.memory_space<vmem>>, vector<8x128xf32>
    %c0_2 = arith.constant 0 : index
    %c0_3 = arith.constant 0 : index
    %6 = vector.load %arg3[%c0_2, %c0_3] : memref<8x128xf32, #tpu.memory_space<vmem>>, vector<8x128xf32>
    %7 = arith.subf %5, %6 : vector<8x128xf32>
    %8 = arith.mulf %7, %7 : vector<8x128xf32>
    %9 = tpu.iota {dimensions = array<i32: 0>} : vector<128x4xi32>
    %10 = tpu.iota {dimensions = array<i32: 1>} : vector<128x4xi32>
    %c32_i32 = arith.constant 32 : i32
    %11 = vector.broadcast %c32_i32 : i32 to vector<128x4xi32>
    %12 = arith.muli %10, %11 : vector<128x4xi32>
    %13 = arith.cmpi sge, %9, %12 : vector<128x4xi32>
    %c1_i32_4 = arith.constant 1 : i32
    %14 = vector.broadcast %c1_i32_4 : i32 to vector<128x4xi32>
    %15 = arith.addi %10, %14 : vector<128x4xi32>
    %c32_i32_5 = arith.constant 32 : i32
    %16 = vector.broadcast %c32_i32_5 : i32 to vector<128x4xi32>
    %17 = arith.muli %15, %16 : vector<128x4xi32>
    %18 = arith.cmpi slt, %9, %17 : vector<128x4xi32>
    %19 = arith.andi %13, %18 : vector<128x4xi1>
    %20 = arith.extui %19 : vector<128x4xi1> to vector<128x4xi32>
    %21 = arith.sitofp %20 : vector<128x4xi32> to vector<128x4xf32>
    %cst = arith.constant dense<0.000000e+00> : vector<8x4xf32>
    %22 = tpu.matmul %8, %21, %cst {dimension_numbers = #tpu.dot_dimension_numbers<[1], [0], [0], [1], [0, 0, 1, 1], [], []>} : vector<8x128xf32>, vector<128x4xf32>, vector<8x4xf32> -> vector<8x4xf32>
    %23 = tpu.iota {dimensions = array<i32: 0>} : vector<8x4xi32>
    %24 = tpu.iota {dimensions = array<i32: 1>} : vector<8x4xi32>
    %c8_i32 = arith.constant 8 : i32
    %25 = arith.muli %1, %c8_i32 : i32
    %26 = vector.broadcast %25 : i32 to vector<8x4xi32>
    %27 = arith.addi %26, %23 : vector<8x4xi32>
    %c4_i32 = arith.constant 4 : i32
    %28 = vector.broadcast %c4_i32 : i32 to vector<8x4xi32>
    %29 = arith.muli %27, %28 : vector<8x4xi32>
    %30 = arith.addi %29, %24 : vector<8x4xi32>
    %c8_i32_6 = arith.constant 8 : i32
    %31 = vector.broadcast %c8_i32_6 : i32 to vector<8x4xi32>
    %32 = arith.cmpi slt, %30, %31 : vector<8x4xi32>
    %cst_7 = arith.constant 0.000000e+00 : f32
    %33 = vector.broadcast %cst_7 : f32 to vector<8x4xf32>
    %34 = arith.select %32, %22, %33 : vector<8x4xi1>, vector<8x4xf32>
    %35 = vector.shape_cast %34 : vector<8x4xf32> to vector<1x8x4xf32>
    %cst_8 = arith.constant dense<0.000000e+00> : vector<1xf32>
    %36 = vector.multi_reduction <add>, %35, %cst_8 [1, 2] : vector<1x8x4xf32> to vector<1xf32>
    %37 = vector.shape_cast %36 : vector<1xf32> to vector<1x1x1xf32>
    %38 = vector.extract %37[0, 0, 0] : f32 from vector<1x1x1xf32>
    %39 = tpu.iota {dimensions = array<i32: 1>} : vector<1x128xi32>
    %c0_9 = arith.constant 0 : index
    %c0_10 = arith.constant 0 : index
    %40 = vector.load %arg6[%c0_9, %c0_10] : memref<1x128xf32, #tpu.memory_space<vmem>>, vector<1x128xf32>
    %c128_i32 = arith.constant 128 : i32
    %c0_i32_11 = arith.constant 0 : i32
    %41 = arith.cmpi eq, %c128_i32, %c0_i32_11 : i32
    %c1_i32_12 = arith.constant 1 : i32
    %42 = arith.select %41, %c1_i32_12, %c128_i32 : i32
    %43 = arith.remsi %arg1, %42 : i32
    %c0_i32_13 = arith.constant 0 : i32
    %44 = arith.cmpi ne, %43, %c0_i32_13 : i32
    %c0_i32_14 = arith.constant 0 : i32
    %45 = arith.cmpi slt, %43, %c0_i32_14 : i32
    %c0_i32_15 = arith.constant 0 : i32
    %46 = arith.cmpi slt, %42, %c0_i32_15 : i32
    %47 = arith.xori %45, %46 : i1
    %48 = arith.andi %47, %44 : i1
    %49 = arith.addi %43, %42 : i32
    %50 = arith.select %48, %49, %43 : i32
    %51 = vector.broadcast %50 : i32 to vector<1x128xi32>
    %52 = arith.cmpi eq, %39, %51 : vector<1x128xi32>
    %cst_16 = arith.constant 0.000000e+00 : f32
    %53 = vector.broadcast %38 : f32 to vector<1x128xf32>
    %54 = vector.broadcast %cst_16 : f32 to vector<1x128xf32>
    %55 = arith.select %52, %53, %54 : vector<1x128xi1>, vector<1x128xf32>
    %56 = arith.addf %40, %55 : vector<1x128xf32>
    %c0_17 = arith.constant 0 : index
    %c0_18 = arith.constant 0 : index
    %57 = vector.load %arg6[%c0_17, %c0_18] : memref<1x128xf32, #tpu.memory_space<vmem>>, vector<1x128xf32>
    tpu.vector_store %arg6[%c0_17, %c0_18], %56 {strides = array<i32>} : memref<1x128xf32, #tpu.memory_space<vmem>>, vector<1x128xf32>,
    %cst_19 = arith.constant 0xFF800000 : f32
    %58 = vector.broadcast %cst_19 : f32 to vector<8x4xf32>
    %59 = arith.select %32, %22, %58 : vector<8x4xi1>, vector<8x4xf32>
    %c0_20 = arith.constant 0 : index
    %c0_21 = arith.constant 0 : index
    %60 = vector.load %arg7[%c0_20, %c0_21] : memref<1x128xf32, #tpu.memory_space<vmem>>, vector<1x128xf32>
    %61 = vector.shape_cast %59 : vector<8x4xf32> to vector<1x8x4xf32>
    %cst_22 = arith.constant dense<0xFF800000> : vector<1xf32>
    %62 = vector.multi_reduction <maximumf>, %61, %cst_22 [1, 2] : vector<1x8x4xf32> to vector<1xf32>
    %63 = vector.shape_cast %62 : vector<1xf32> to vector<1x1x1xf32>
    %64 = vector.extract %63[0, 0, 0] : f32 from vector<1x1x1xf32>
    %c1_i32_23 = arith.constant 1 : i32
    %65 = vector.broadcast %c1_i32_23 : i32 to vector<1x128xi32>
    %66 = arith.cmpi eq, %39, %65 : vector<1x128xi32>
    %67 = vector.broadcast %64 : f32 to vector<1x128xf32>
    %68 = arith.select %66, %67, %60 : vector<1x128xi1>, vector<1x128xf32>
    %cst_24 = arith.constant 0xFF800000 : f32
    %69 = vector.broadcast %cst_24 : f32 to vector<1x128xf32>
    %70 = vector.shape_cast %68 : vector<1x128xf32> to vector<1x1x128xf32>
    %cst_25 = arith.constant dense<0xFF800000> : vector<1xf32>
    %71 = vector.multi_reduction <maximumf>, %70, %cst_25 [1, 2] : vector<1x1x128xf32> to vector<1xf32>
    %72 = vector.shape_cast %71 : vector<1xf32> to vector<1x1x1xf32>
    %73 = vector.extract %72[0, 0, 0] : f32 from vector<1x1x1xf32>
    %c0_i32_26 = arith.constant 0 : i32
    %74 = vector.broadcast %c0_i32_26 : i32 to vector<1x128xi32>
    %75 = arith.cmpi eq, %39, %74 : vector<1x128xi32>
    %76 = vector.broadcast %73 : f32 to vector<1x128xf32>
    %77 = arith.select %75, %76, %69 : vector<1x128xi1>, vector<1x128xf32>
    %c0_27 = arith.constant 0 : index
    %c0_28 = arith.constant 0 : index
    %78 = vector.load %arg7[%c0_27, %c0_28] : memref<1x128xf32, #tpu.memory_space<vmem>>, vector<1x128xf32>
    tpu.vector_store %arg7[%c0_27, %c0_28], %77 {strides = array<i32>} : memref<1x128xf32, #tpu.memory_space<vmem>>, vector<1x128xf32>,
    %c0_i32_29 = arith.constant 0 : i32
    %79 = arith.cmpi eq, %arg1, %c0_i32_29 : i32
    %80 = arith.extui %79 : i1 to i32
    %c0_i32_30 = arith.constant 0 : i32
    %81 = arith.cmpi ne, %80, %c0_i32_30 : i32
    scf.if %81 {
      %82 = tpu.iota {dimensions = array<i32: 0>} : vector<8x128xi32>
      %c0_i32_31 = arith.constant 0 : i32
      %83 = vector.broadcast %c0_i32_31 : i32 to vector<8x128xi32>
      %84 = arith.cmpi eq, %82, %83 : vector<8x128xi32>
      %c0_32 = arith.constant 0 : index
      %c0_33 = arith.constant 0 : index
      %85 = vector.load %arg6[%c0_32, %c0_33] : memref<1x128xf32, #tpu.memory_space<vmem>>, vector<1x128xf32>
      %cst_34 = arith.constant 0.000000e+00 : f32
      %86 = vector.shape_cast %85 : vector<1x128xf32> to vector<1x128xf32>
      %87 = vector.broadcast %86 : vector<1x128xf32> to vector<8x128xf32>
      %88 = vector.broadcast %cst_34 : f32 to vector<8x128xf32>
      %89 = arith.select %84, %87, %88 : vector<8x128xi1>, vector<8x128xf32>
      %c0_35 = arith.constant 0 : index
      %c0_36 = arith.constant 0 : index
      %90 = vector.load %arg4[%c0_35, %c0_36] : memref<8x128xf32, #tpu.memory_space<vmem>>, vector<8x128xf32>
      tpu.vector_store %arg4[%c0_35, %c0_36], %89 {strides = array<i32>} : memref<8x128xf32, #tpu.memory_space<vmem>>, vector<8x128xf32>,
      %c0_37 = arith.constant 0 : index
      %c0_38 = arith.constant 0 : index
      %91 = vector.load %arg7[%c0_37, %c0_38] : memref<1x128xf32, #tpu.memory_space<vmem>>, vector<1x128xf32>
      %cst_39 = arith.constant 0xFF800000 : f32
      %92 = vector.shape_cast %91 : vector<1x128xf32> to vector<1x128xf32>
      %93 = vector.broadcast %92 : vector<1x128xf32> to vector<8x128xf32>
      %94 = vector.broadcast %cst_39 : f32 to vector<8x128xf32>
      %95 = arith.select %84, %93, %94 : vector<8x128xi1>, vector<8x128xf32>
      %c0_40 = arith.constant 0 : index
      %c0_41 = arith.constant 0 : index
      %96 = vector.load %arg5[%c0_40, %c0_41] : memref<8x128xf32, #tpu.memory_space<vmem>>, vector<8x128xf32>
      tpu.vector_store %arg5[%c0_40, %c0_41], %95 {strides = array<i32>} : memref<8x128xf32, #tpu.memory_space<vmem>>, vector<8x128xf32>,
    } else {
    }
    return
  }
  func.func @transform_0(%arg0: i32, %arg1: i32) -> (i32, i32) {
    %c1_i32 = arith.constant 1 : i32
    %0 = arith.muli %arg0, %c1_i32 : i32
    %1 = arith.addi %0, %arg1 : i32
    %c0_i32 = arith.constant 0 : i32
    %c0_i32_0 = arith.constant 0 : i32
    return %1, %c0_i32 : i32, i32
  }
  func.func @transform_1(%arg0: i32, %arg1: i32) -> (i32, i32) {
    %c1_i32 = arith.constant 1 : i32
    %0 = arith.muli %arg0, %c1_i32 : i32
    %1 = arith.addi %0, %arg1 : i32
    %c0_i32 = arith.constant 0 : i32
    %c0_i32_0 = arith.constant 0 : i32
    return %1, %c0_i32 : i32, i32
  }
  func.func @transform_2(%arg0: i32, %arg1: i32) -> (i32, i32) {
    %c0_i32 = arith.constant 0 : i32
    %c0_i32_0 = arith.constant 0 : i32
    return %arg0, %c0_i32 : i32, i32
  }
  func.func @transform_3(%arg0: i32, %arg1: i32) -> (i32, i32) {
    %c0_i32 = arith.constant 0 : i32
    %c0_i32_0 = arith.constant 0 : i32
    return %arg0, %c0_i32 : i32, i32
  }
}

</mosaic_0001>

<llo_original>
// kernel: tpu_custom_call.1
$region0: #{tpu_custom_call.1}
  #allocation0 [shape = 'u32[]', space=smem, size = 0x4, offset = 0x4, fixed_abs, tag = 'smem constant byte address 0x4 - core index']
  #allocation1 [shape = 'u32[144,128]{1,0:T(1,128)}', space=vmem, size = 0x12000, scoped, tag = 'internal scratch']
  #allocation2 [shape = 'f32[1,128]{1,0:T(1,128)}', space=vmem, size = 0x200, scoped, tag = 'scratch operand']
  #allocation3 [shape = 'f32[1,128]{1,0:T(1,128)}', space=vmem, size = 0x200, scoped, tag = 'scratch operand']
  %s0 = inlined_call_operand.hbm [shape: f32[8,128], index: 0, kind: input, shape index: {}]
  %s1 = inlined_call_operand.hbm [shape: f32[8,128], index: 1, kind: input, shape index: {}]
  %s2 = inlined_call_operand.hbm [shape: f32[8,128], index: 2, kind: output, shape index: {0}]
  %s3 = inlined_call_operand.hbm [shape: f32[8,128], index: 3, kind: output, shape index: {1}]
  %4 = xla_tuple %s2, %s3
  %s5 = sld [smem:[#allocation0]]
  $region42: #{tpu_custom_call.1} parent=0
    _
  %s7 = ssub.s32 1, %s5
  %s8 = scalar_select 0, %s7, %s5
  $region1: #{tpu_custom_call.1} parent=0
    #allocation4 [shape = 'u8[4096]{0}', space=vmem, size = 0x1000, scoped, tag = 'input window, operand 0, single buffered']
    #allocation5 [shape = 's32[1]{0}', space=sflag, size = 0x4, scoped, tag = 'scoped memory for tpu_custom_call.1']
    #allocation6 [shape = 's32[1]{0}', space=sflag, size = 0x4, scoped, tag = 'scoped memory for tpu_custom_call.1']
    #allocation7 [shape = 'u8[4096]{0}', space=vmem, size = 0x1000, scoped, tag = 'input window, operand 1, single buffered']
    #allocation8 [shape = 's32[1]{0}', space=sflag, size = 0x4, scoped, tag = 'scoped memory for tpu_custom_call.1']
    #allocation9 [shape = 'u8[4096]{0}', space=vmem, size = 0x1000, scoped, tag = 'output window, operand 0, single buffered']
    #allocation10 [shape = 'u8[4096]{0}', space=vmem, size = 0x1000, scoped, tag = 'output window, operand 1, single buffered']
    #allocation11 [shape = 's32[1]{0}', space=sflag, size = 0x4, scoped, tag = 'scoped memory for tpu_custom_call.1']
    %9 = vsyncpa [#allocation5], 0
    %10 = vsyncpa [#allocation8], 0
    %11 = vsyncpa [#allocation6], 0
    %12 = vsyncpa [#allocation11], 0
    // Predicated region
    $region2: #{tpu_custom_call.1} parent=1 // pred_check
      _
    $region3: #{tpu_custom_call.1} parent=1 // pred_check_branch
      %14 = sbr.rel (0) target = $region5
    $region4: #{tpu_custom_call.1} parent=1 // pred_region
      %s15 = sadd.s32 0, 0
      %s17 = ssub.s32 128, 128
      %18 = vsyncadd [#allocation5], %s17
      %s19 = smul.addr %s15, 128
      %s20 = scalar_lea.hbm %s0, %s19
      %s22 = sshll.u32 [#allocation4], 4
      %s23 = int_to_ptr.vmem [resolvable:$true] %s22
      %25 = dma.hbm_to_vmem [thread:$0]  %s20, 128, %s23, [#allocation5]
    $region5: #{tpu_custom_call.1} parent=1 // pred_fallthru
      _
    // Predicated region
    $region6: #{tpu_custom_call.1} parent=1 // pred_check
      _
    $region7: #{tpu_custom_call.1} parent=1 // pred_check_branch
      %27 = sbr.rel (0) target = $region9
    $region8: #{tpu_custom_call.1} parent=1 // pred_region
      %s28 = sadd.s32 0, 0
      %s30 = ssub.s32 128, 128
      %31 = vsyncadd [#allocation8], %s30
      %s32 = smul.addr %s28, 128
      %s33 = scalar_lea.hbm %s1, %s32
      %s35 = sshll.u32 [#allocation7], 4
      %s36 = int_to_ptr.vmem [resolvable:$true] %s35
      %38 = dma.hbm_to_vmem [thread:$0]  %s33, 128, %s36, [#allocation8]
    $region9: #{tpu_custom_call.1} parent=1 // pred_fallthru
      _
    // Predicated region
    $region10: #{tpu_custom_call.1} parent=1 // pred_check
      _
    $region11: #{tpu_custom_call.1} parent=1 // pred_check_branch
      %40 = sbr.rel (0) target = $region13
    $region12: #{tpu_custom_call.1} parent=1 // pred_region
      %41 = dma.done [#allocation5], 128
    $region13: #{tpu_custom_call.1} parent=1 // pred_fallthru
      _
    // Predicated region
    $region14: #{tpu_custom_call.1} parent=1 // pred_check
      _
    $region15: #{tpu_custom_call.1} parent=1 // pred_check_branch
      %43 = sbr.rel (0) target = $region17
    $region16: #{tpu_custom_call.1} parent=1 // pred_region
      %44 = dma.done [#allocation8], 128
    $region17: #{tpu_custom_call.1} parent=1 // pred_fallthru
      _
    %s45 = sadd.s32 0, 0
    %s46 = sadd.s32 0, 0
    %s47 = sadd.s32 0, 0
    %p48 = scmp.eq.s32.totalorder 0, 0
    // Predicated region
    $region18: #{tpu_custom_call.1} parent=1 // pred_check
      %p49 = pneg %p48
    $region19: #{tpu_custom_call.1} parent=1 // pred_check_branch
      %51 = sbr.rel (%p49) target = $region21
    $region20: #{tpu_custom_call.1} parent=1 // pred_region
      %52 = vst [vmem:[#allocation2] sm:$0x1] 0.0
      %53 = vst [vmem:[#allocation3] sm:$0x1] -inf
    $region21: #{tpu_custom_call.1} parent=1 // pred_fallthru
      _
    %v54 = vld [vmem:[#allocation4] sm:$0xff]
    %v55 = vld [vmem:[#allocation7] sm:$0xff]
    %v56 = vsub.f32 %v54, %v55
    %v57 = vmul.f32 %v56, %v56
    %v58 = vlaneseq
    %v59 = vshrl.u32 %v58, 7
    %v60 = vadd.s32 %v59, 8
    %v61 = vadd.s32 %v59, 16
    %v62 = vadd.s32 %v59, 24
    %v63 = vadd.s32 %v59, 32
    %v64 = vadd.s32 %v59, 40
    %v65 = vadd.s32 %v59, 48
    %v66 = vadd.s32 %v59, 56
    %v67 = vadd.s32 %v59, 64
    %v68 = vadd.s32 %v59, 72
    %v69 = vadd.s32 %v59, 80
    %v70 = vadd.s32 %v59, 88
    %v71 = vadd.s32 %v59, 96
    %v72 = vadd.s32 %v59, 104
    %v73 = vadd.s32 %v59, 112
    %v74 = vadd.s32 %v59, 120
    %v75 = vlaneseq
    %v76 = vand.u32 %v75, 127
    %v77 = vmul.u32 %v76, 32
    %vm78 = vcmp.ge.s32.totalorder %v59, %v77
    %vm79 = vcmp.ge.s32.totalorder %v60, %v77
    %vm80 = vcmp.ge.s32.totalorder %v61, %v77
    %vm81 = vcmp.ge.s32.totalorder %v62, %v77
    %vm82 = vcmp.ge.s32.totalorder %v63, %v77
    %vm83 = vcmp.ge.s32.totalorder %v64, %v77
    %vm84 = vcmp.ge.s32.totalorder %v65, %v77
    %vm85 = vcmp.ge.s32.totalorder %v66, %v77
    %vm86 = vcmp.ge.s32.totalorder %v67, %v77
    %vm87 = vcmp.ge.s32.totalorder %v68, %v77
    %vm88 = vcmp.ge.s32.totalorder %v69, %v77
    %vm89 = vcmp.ge.s32.totalorder %v70, %v77
    %vm90 = vcmp.ge.s32.totalorder %v71, %v77
    %vm91 = vcmp.ge.s32.totalorder %v72, %v77
    %vm92 = vcmp.ge.s32.totalorder %v73, %v77
    %vm93 = vcmp.ge.s32.totalorder %v74, %v77
    %v94 = vadd.s32 %v76, 1
    %v95 = vmul.u32 %v94, 32
    %vm96 = vcmp.lt.s32.totalorder %v59, %v95
    %vm97 = vcmp.lt.s32.totalorder %v60, %v95
    %vm98 = vcmp.lt.s32.totalorder %v61, %v95
    %vm99 = vcmp.lt.s32.totalorder %v62, %v95
    %vm100 = vcmp.lt.s32.totalorder %v63, %v95
    %vm101 = vcmp.lt.s32.totalorder %v64, %v95
    %vm102 = vcmp.lt.s32.totalorder %v65, %v95
    %vm103 = vcmp.lt.s32.totalorder %v66, %v95
    %vm104 = vcmp.lt.s32.totalorder %v67, %v95
    %vm105 = vcmp.lt.s32.totalorder %v68, %v95
    %vm106 = vcmp.lt.s32.totalorder %v69, %v95
    %vm107 = vcmp.lt.s32.totalorder %v70, %v95
    %vm108 = vcmp.lt.s32.totalorder %v71, %v95
    %vm109 = vcmp.lt.s32.totalorder %v72, %v95
    %vm110 = vcmp.lt.s32.totalorder %v73, %v95
    %vm111 = vcmp.lt.s32.totalorder %v74, %v95
    %vm112 = vmand %vm78, %vm96
    %vm113 = vmand %vm79, %vm97
    %vm114 = vmand %vm80, %vm98
    %vm115 = vmand %vm81, %vm99
    %vm116 = vmand %vm82, %vm100
    %vm117 = vmand %vm83, %vm101
    %vm118 = vmand %vm84, %vm102
    %vm119 = vmand %vm85, %vm103
    %vm120 = vmand %vm86, %vm104
    %vm121 = vmand %vm87, %vm105
    %vm122 = vmand %vm88, %vm106
    %vm123 = vmand %vm89, %vm107
    %vm124 = vmand %vm90, %vm108
    %vm125 = vmand %vm91, %vm109
    %vm126 = vmand %vm92, %vm110
    %vm127 = vmand %vm93, %vm111
    %v128 = vsel %vm112, 1, 0
    %v129 = vsel %vm113, 1, 0
    %v130 = vsel %vm114, 1, 0
    %v131 = vsel %vm115, 1, 0
    %v132 = vsel %vm116, 1, 0
    %v133 = vsel %vm117, 1, 0
    %v134 = vsel %vm118, 1, 0
    %v135 = vsel %vm119, 1, 0
    %v136 = vsel %vm120, 1, 0
    %v137 = vsel %vm121, 1, 0
    %v138 = vsel %vm122, 1, 0
    %v139 = vsel %vm123, 1, 0
    %v140 = vsel %vm124, 1, 0
    %v141 = vsel %vm125, 1, 0
    %v142 = vsel %vm126, 1, 0
    %v143 = vsel %vm127, 1, 0
    %v144 = vcvt.s32.f32 %v128
    %v145 = vcvt.s32.f32 %v129
    %v146 = vcvt.s32.f32 %v130
    %v147 = vcvt.s32.f32 %v131
    %v148 = vcvt.s32.f32 %v132
    %v149 = vcvt.s32.f32 %v133
    %v150 = vcvt.s32.f32 %v134
    %v151 = vcvt.s32.f32 %v135
    %v152 = vcvt.s32.f32 %v136
    %v153 = vcvt.s32.f32 %v137
    %v154 = vcvt.s32.f32 %v138
    %v155 = vcvt.s32.f32 %v139
    %v156 = vcvt.s32.f32 %v140
    %v157 = vcvt.s32.f32 %v141
    %v158 = vcvt.s32.f32 %v142
    %v159 = vcvt.s32.f32 %v143
    %160 = vmatprep.subr.mxu0 0.0
    %161 = vmatpush1.msra.mxu0 %v159
    %162 = vmatprep.subr.mxu0 0.0
    %163 = vmatpush1.msra.mxu0 %v158
    %164 = vmatprep.subr.mxu0 0.0
    %165 = vmatpush1.msra.mxu0 %v157
    %166 = vmatprep.subr.mxu0 0.0
    %167 = vmatpush1.msra.mxu0 %v156
    %168 = vmatprep.subr.mxu0 0.0
    %169 = vmatpush1.msra.mxu0 %v155
    %170 = vmatprep.subr.mxu0 0.0
    %171 = vmatpush1.msra.mxu0 %v154
    %172 = vmatprep.subr.mxu0 0.0
    %173 = vmatpush1.msra.mxu0 %v153
    %174 = vmatprep.subr.mxu0 0.0
    %175 = vmatpush1.msra.mxu0 %v152
    %176 = vmatprep.subr.mxu0 0.0
    %177 = vmatpush1.msra.mxu0 %v151
    %178 = vmatprep.subr.mxu0 0.0
    %179 = vmatpush1.msra.mxu0 %v150
    %180 = vmatprep.subr.mxu0 0.0
    %181 = vmatpush1.msra.mxu0 %v149
    %182 = vmatprep.subr.mxu0 0.0
    %183 = vmatpush1.msra.mxu0 %v148
    %184 = vmatprep.subr.mxu0 0.0
    %185 = vmatpush1.msra.mxu0 %v147
    %186 = vmatprep.subr.mxu0 0.0
    %187 = vmatpush1.msra.mxu0 %v146
    %188 = vmatprep.subr.mxu0 0.0
    %189 = vmatpush1.msra.mxu0 %v145
    %190 = vmatprep.subr.mxu0 0.0
    %191 = vmatpush1.msra.mxu0 %v144
    %192 = vmatprep.subr.mxu0 0.0
    %193 = vmatpush2.msra.mxu0 0.0
    %194 = vmatprep.subr.mxu0 0.0
    %195 = vmatpush2.msra.mxu0 0.0
    %196 = vmatprep.subr.mxu0 0.0
    %197 = vmatpush2.msra.mxu0 0.0
    %198 = vmatprep.subr.mxu0 0.0
    %199 = vmatpush2.msra.mxu0 0.0
    %200 = vmatprep.subr.mxu0 0.0
    %201 = vmatpush2.msra.mxu0 0.0
    %202 = vmatprep.subr.mxu0 0.0
    %203 = vmatpush2.msra.mxu0 0.0
    %204 = vmatprep.subr.mxu0 0.0
    %205 = vmatpush2.msra.mxu0 0.0
    %206 = vmatprep.subr.mxu0 0.0
    %207 = vmatpush2.msra.mxu0 0.0
    %208 = vmatprep.subr.mxu0 0.0
    %209 = vmatpush2.msra.mxu0 0.0
    %210 = vmatprep.subr.mxu0 0.0
    %211 = vmatpush2.msra.mxu0 0.0
    %212 = vmatprep.subr.mxu0 0.0
    %213 = vmatpush2.msra.mxu0 0.0
    %214 = vmatprep.subr.mxu0 0.0
    %215 = vmatpush2.msra.mxu0 0.0
    %216 = vmatprep.subr.mxu0 0.0
    %217 = vmatpush2.msra.mxu0 0.0
    %218 = vmatprep.subr.mxu0 0.0
    %219 = vmatpush2.msra.mxu0 0.0
    %220 = vmatprep.subr.mxu0 0.0
    %221 = vmatpush2.msra.mxu0 0.0
    %222 = vmatprep.subr.mxu0 0.0
    %223 = vmatpush2.msra.mxu0 0.0
    %224 = vmatprep.mubr.f32.mxu0 0.0
    %225 = vmatmul.mubr.f32.gmra.mxu0 %v57
    %v226 = vpop.f32.mrf.mxu0
    %v227 = vadd.f32 0.0, %v226
    %v228 = vpop.f32.mrf.mxu0
    %229 = vdwg.mxu0
    %s230 = smul.u32 %s47, 8
    %v231 = vstv %s230
    %v232 = vadd.s32 %v231, %v59
    %v233 = vmul.u32 %v232, 4
    %v234 = vadd.s32 %v233, %v76
    %vm235 = vcmp.lt.s32.totalorder %v234, 8
    %v236 = vsel %vm235, %v227, 0.0
    %vm237 = vcmask 31744
    %v238 = vsel %vm237, %v236, 0.0
    %239 = vadd.xlane.f32.xlu0 %v238
    %v240 = vpop.xlane.xlu0 %239
    %v241 = vrot.slane %v240, 4
    %v242 = vadd.f32 %v240, %v241
    %v243 = vrot.slane %v242, 2
    %v244 = vadd.f32 %v242, %v243
    %v245 = vrot.slane %v244, 1
    %v246 = vadd.f32 %v244, %v245
    %s247 = vtos %v246
    %v248 = vld [vmem:[#allocation2] sm:$0x1]
    %s249 = ssub.s32 0, 0
    %s250 = ssub.s32 0, 0
    %p251 = scmp.ne.s32.totalorder 0, 0
    %p252 = scmp.lt.s32.totalorder 0, 0
    %p253 = pnand %p252, %p251
    %p254 = pneg %p253
    %s255 = sadd.s32 0, 128
    %s256 = scalar_select %p254, %s255, 0
    %v257 = vstv %s256
    %vm258 = vcmp.eq.s32.totalorder %v76, %v257
    %v259 = vstv %s247
    %v260 = vsel %vm258, %v259, 0.0
    %v261 = vadd.f32 %v248, %v260
    %262 = vst [vmem:[#allocation2] sm:$0x1] %v261
    %v263 = vsel %vm235, %v227, -inf
    %v264 = vld [vmem:[#allocation3] sm:$0x1]
    %v265 = vsel %vm237, %v263, -inf
    %266 = vmax.xlane.f32.xlu0 %v265
    %v267 = vpop.xlane.xlu0 %266
    %v268 = vrot.slane %v267, 4
    %v269 = vmax.f32 %v267, %v268
    %v270 = vrot.slane %v269, 2
    %v271 = vmax.f32 %v269, %v270
    %v272 = vrot.slane %v271, 1
    %v273 = vmax.f32 %v271, %v272
    %s274 = vtos %v273
    %vm275 = vcmp.eq.s32.totalorder %v76, 1
    %v276 = vstv %s274
    %v277 = vsel %vm275, %v276, %v264
    %vm278 = vcmask 1040384
    %v279 = vsel %vm278, %v277, -inf
    %280 = vmax.xlane.f32.xlu0 %v279
    %v281 = vpop.xlane.xlu0 %280
    %v282 = vrot.slane %v281, 4
    %v283 = vmax.f32 %v281, %v282
    %v284 = vrot.slane %v283, 2
    %v285 = vmax.f32 %v283, %v284
    %v286 = vrot.slane %v285, 1
    %v287 = vmax.f32 %v285, %v286
    %s288 = vtos %v287
    %vm289 = vcmp.eq.s32.totalorder %v76, 0
    %v290 = vstv %s288
    %v291 = vsel %vm289, %v290, -inf
    %292 = vst [vmem:[#allocation3] sm:$0x1] %v291
    // Predicated region
    $region22: #{tpu_custom_call.1} parent=1 // pred_check
      %p293 = pneg %p48
    $region23: #{tpu_custom_call.1} parent=1 // pred_check_branch
      %295 = sbr.rel (%p293) target = $region25
    $region24: #{tpu_custom_call.1} parent=1 // pred_region
      %vm296 = vcmp.eq.s32.totalorder %v59, 0
      %v297 = vld [vmem:[#allocation2] sm:$0x1]
      %v299 = vlaneseq
      %v300 = vshrl.u32 %v299, 7
      %v301 = vsub.s32 0, %v300
      %v302 = vrot.slane %v297, %v301
      %v304 = vsel %vm296, %v302, 0.0
      %305 = vst [vmem:[#allocation9] sm:$0xff] %v304
      %v306 = vld [vmem:[#allocation3] sm:$0x1]
      %v308 = vlaneseq
      %v309 = vshrl.u32 %v308, 7
      %v310 = vsub.s32 0, %v309
      %v311 = vrot.slane %v306, %v310
      %v313 = vsel %vm296, %v311, -inf
      %314 = vst [vmem:[#allocation10] sm:$0xff] %v313
    $region25: #{tpu_custom_call.1} parent=1 // pred_fallthru
      _
    // Predicated region
    $region26: #{tpu_custom_call.1} parent=1 // pred_check
      _
    $region27: #{tpu_custom_call.1} parent=1 // pred_check_branch
      %316 = sbr.rel (0) target = $region29
    $region28: #{tpu_custom_call.1} parent=1 // pred_region
      %s318 = ssub.s32 128, 128
      %319 = vsyncadd [#allocation6], %s318
      %s321 = sshll.u32 [#allocation9], 4
      %s322 = int_to_ptr.vmem [resolvable:$true] %s321
      %324 = dma.vmem_to_hbm [thread:$0]  %s322, 128, %s2, [#allocation6]
    $region29: #{tpu_custom_call.1} parent=1 // pred_fallthru
      _
    // Predicated region
    $region30: #{tpu_custom_call.1} parent=1 // pred_check
      _
    $region31: #{tpu_custom_call.1} parent=1 // pred_check_branch
      %326 = sbr.rel (0) target = $region33
    $region32: #{tpu_custom_call.1} parent=1 // pred_region
      %s328 = ssub.s32 128, 128
      %329 = vsyncadd [#allocation11], %s328
      %s331 = sshll.u32 [#allocation10], 4
      %s332 = int_to_ptr.vmem [resolvable:$true] %s331
      %334 = dma.vmem_to_hbm [thread:$0]  %s332, 128, %s3, [#allocation11]
    $region33: #{tpu_custom_call.1} parent=1 // pred_fallthru
      _
    // Predicated region
    $region34: #{tpu_custom_call.1} parent=1 // pred_check
      _
    $region35: #{tpu_custom_call.1} parent=1 // pred_check_branch
      %336 = sbr.rel (0) target = $region37
    $region36: #{tpu_custom_call.1} parent=1 // pred_region
      %337 = dma.done [#allocation6], 128
    $region37: #{tpu_custom_call.1} parent=1 // pred_fallthru
      _
    // Predicated region
    $region38: #{tpu_custom_call.1} parent=1 // pred_check
      _
    $region39: #{tpu_custom_call.1} parent=1 // pred_check_branch
      %339 = sbr.rel (0) target = $region41
    $region40: #{tpu_custom_call.1} parent=1 // pred_region
      %340 = dma.done [#allocation11], 128
    $region41: #{tpu_custom_call.1} parent=1 // pred_fallthru
      _
    %341 = vsyncpa [#allocation5], 1
    %342 = vsyncpa [#allocation8], 1
    %343 = vsyncpa [#allocation6], 1
    %344 = vsyncpa [#allocation11], 1

</llo_original>
